<compile_context>
chip_gen: v5e
topology: v5e:2x2
jax: 0.10.0
libtpu: 0.0.40
codegen_flags: <defaults>
</compile_context>

<pallas_src>
import jax
import jax.numpy as jnp
from jax.experimental import pallas as pl
from jax.experimental.pallas import tpu as pltpu


def fc_model_kernel(x_ref, p1_ref, p3_ref, o_ref):
    """One batch tile: out = relu(x @ W1 + b1) @ W3 + b3, in packed layout.

    x_ref : (TBP, pack*F)          packed activations
    p1_ref: (pack*F + 1, pack*H)   block-diag W1 with tiled b1 as last row
    p3_ref: (pack*H + 1, pack*C)   block-diag W3 with tiled b3 as last row
    o_ref : (TBP, pack*C)          packed output (lane-dense: pack*C == 128)
    """
    x = x_ref[...]
    p1 = p1_ref[...]
    p3 = p3_ref[...]

    h = jnp.dot(x, p1[:-1, :], preferred_element_type=jnp.float32) + p1[-1:, :]
    h = jnp.maximum(h, 0.0)                                   # ReLU
    out = jnp.dot(h, p3[:-1, :], preferred_element_type=jnp.float32) + p3[-1:, :]
    o_ref[...] = out.astype(o_ref.dtype)


def _pack_params(w, b, pack):
    """Block-diagonal weight (pack copies) with the tiled bias as the last row."""
    w_blk = jax.scipy.linalg.block_diag(*([w] * pack))        # (pack*I, pack*O)
    b_blk = jnp.tile(jnp.reshape(b, (1, -1)), (1, pack))      # (1, pack*O)
    return jnp.concatenate([w_blk, b_blk], axis=0)            # (pack*I + 1, pack*O)


def fc_model_forward(x, w1, b1, w3, b3, *, row_tile=512):
    """x: (B, F) f32; w1: (F, H); b1: (1, H)/(H,); w3: (H, C); b3: (1, C)/(C,).
    Returns (B, C) f32.  row_tile = packed rows per grid step (multiple of 8)."""
    B, F = x.shape
    H = w1.shape[1]
    C = w3.shape[1]

    # Pack `pack` batch rows per lane-row so loads and stores are lane-dense
    # (output last dim becomes pack*C == 128 when C divides 128).
    pack = 128 // C if (0 < C <= 128 and 128 % C == 0) else 1

    row_tile = max(8, (row_tile // 8) * 8)           # sublane-aligned tile rows
    bp = -(-B // pack)                               # packed rows needed
    if bp <= row_tile:
        tbp = bp                                     # single full-extent tile
    else:
        tbp = row_tile
        bp = -(-bp // tbp) * tbp                     # pad to whole number of tiles
    b_pad = bp * pack

    if b_pad != B:
        x = jnp.pad(x, ((0, b_pad - B), (0, 0)))     # zero rows, sliced off below
    x_packed = x.reshape(bp, pack * F)               # free row-major reshape

    p1 = _pack_params(w1, b1, pack)                  # (pack*F + 1, pack*H)
    p3 = _pack_params(w3, b3, pack)                  # (pack*H + 1, pack*C)

    out_packed = pl.pallas_call(
        fc_model_kernel,
        out_shape=jax.ShapeDtypeStruct((bp, pack * C), x.dtype),
        grid=(bp // tbp,),
        in_specs=[
            pl.BlockSpec((tbp, pack * F), lambda i: (i, 0)),   # tiled over batch
            pl.BlockSpec(p1.shape, lambda i: (0, 0)),          # VMEM-resident params
            pl.BlockSpec(p3.shape, lambda i: (0, 0)),          # VMEM-resident params
        ],
        out_specs=pl.BlockSpec((tbp, pack * C), lambda i: (i, 0)),
        compiler_params=pltpu.CompilerParams(
            dimension_semantics=("parallel",),       # ~2x on v7x's dual TensorCores
        ),
    )(x_packed, p1, p3)

    # Free contiguous reshape back to row layout, then drop padding rows.
    return out_packed.reshape(b_pad, C)[:B]


def init_params(key, num_feats, out_chs, hidden=32):
    # Deterministic synthetic init (PyTorch-Linear-style uniform bounds).
    k1, k2, k3, k4 = jax.random.split(key, 4)
    bound1 = 1.0 / jnp.sqrt(num_feats)
    bound3 = 1.0 / jnp.sqrt(hidden)
    # Stored as (in, out) = transposed PyTorch weight layout.
    w1 = jax.random.uniform(k1, (num_feats, hidden), jnp.float32, -bound1, bound1)
    b1 = jax.random.uniform(k2, (1, hidden), jnp.float32, -bound1, bound1)
    w3 = jax.random.uniform(k3, (hidden, out_chs), jnp.float32, -bound3, bound3)
    b3 = jax.random.uniform(k4, (1, out_chs), jnp.float32, -bound3, bound3)
    return w1, b1, w3, b3


def reference_forward(x, w1, b1, w3, b3):
    h = jnp.maximum(x @ w1 + b1, 0.0)
    return h @ w3 + b3


if __name__ == "__main__":
    num_feats, out_chs = 16, 8
    key = jax.random.PRNGKey(0)
    kx1, kx2, kp = jax.random.split(key, 3)

    w1, b1, w3, b3 = init_params(kp, num_feats, out_chs)

    # Case 1: multi-tile grid (batch=256 -> 16 packed rows -> 2 tiles of 8),
    # exercising batch tiling, resident weights and the parallel grid axis.
    x1 = jax.random.normal(kx1, (256, num_feats), jnp.float32)
    out1 = jax.block_until_ready(fc_model_forward(x1, w1, b1, w3, b3, row_tile=8))
    ref1 = reference_forward(x1, w1, b1, w3, b3)
    assert out1.shape == ref1.shape
    assert jnp.allclose(out1, ref1, atol=1e-5, rtol=1e-5)

    # Case 2: ragged batch (not a multiple of the pack factor) -> padding path.
    x2 = jax.random.normal(kx2, (37, num_feats), jnp.float32)
    out2 = jax.block_until_ready(fc_model_forward(x2, w1, b1, w3, b3))
    ref2 = reference_forward(x2, w1, b1, w3, b3)
    assert out2.shape == ref2.shape
    assert jnp.allclose(out2, ref2, atol=1e-5, rtol=1e-5)

    print("KERNEL_OK")
</pallas_src>

<mosaic_0001>
module attributes {stable_mosaic.version = 11 : i64} {
  func.func @fc_model_kernel(%arg0: i32, %arg1: memref<8x256xf32, #tpu.memory_space<vmem>>, %arg2: memref<257x512xf32, #tpu.memory_space<vmem>>, %arg3: memref<513x128xf32, #tpu.memory_space<vmem>>, %arg4: memref<8x128xf32, #tpu.memory_space<vmem>>) attributes {dimension_semantics = [#tpu.dimension_semantics<parallel>], iteration_bounds = array<i64: 2>, scalar_prefetch = 0 : i64, scratch_operands = 0 : i64, tpu.core_type = #tpu.core_type<tc>, window_params = [{transform_indices = @transform_0, window_bounds = array<i64: 8, 256>}, {pipeline_mode = #tpu.pipeline_mode<synchronous>, transform_indices = @transform_1, window_bounds = array<i64: 257, 512>}, {pipeline_mode = #tpu.pipeline_mode<synchronous>, transform_indices = @transform_2, window_bounds = array<i64: 513, 128>}, {transform_indices = @transform_3, window_bounds = array<i64: 8, 128>}]} {
    %c0 = arith.constant 0 : index
    %c0_0 = arith.constant 0 : index
    %0 = vector.load %arg1[%c0, %c0_0] : memref<8x256xf32, #tpu.memory_space<vmem>>, vector<8x256xf32>
    %c0_1 = arith.constant 0 : index
    %c0_2 = arith.constant 0 : index
    %1 = vector.load %arg2[%c0_1, %c0_2] : memref<257x512xf32, #tpu.memory_space<vmem>>, vector<257x512xf32>
    %c0_3 = arith.constant 0 : index
    %c0_4 = arith.constant 0 : index
    %2 = vector.load %arg3[%c0_3, %c0_4] : memref<513x128xf32, #tpu.memory_space<vmem>>, vector<513x128xf32>
    %3 = vector.extract_strided_slice %1 {offsets = [0, 0], sizes = [256, 512], strides = [1, 1]} : vector<257x512xf32> to vector<256x512xf32>
    %cst = arith.constant dense<0.000000e+00> : vector<8x512xf32>
    %4 = tpu.matmul %0, %3, %cst {dimension_numbers = #tpu.dot_dimension_numbers<[1], [0], [0], [1], [0, 0, 1, 1], [], []>} : vector<8x256xf32>, vector<256x512xf32>, vector<8x512xf32> -> vector<8x512xf32>
    %5 = vector.extract_strided_slice %1 {offsets = [256, 0], sizes = [1, 512], strides = [1, 1]} : vector<257x512xf32> to vector<1x512xf32>
    %6 = vector.broadcast %5 : vector<1x512xf32> to vector<8x512xf32>
    %7 = arith.addf %4, %6 : vector<8x512xf32>
    %cst_5 = arith.constant 0.000000e+00 : f32
    %8 = vector.broadcast %cst_5 : f32 to vector<8x512xf32>
    %9 = arith.maximumf %7, %8 : vector<8x512xf32>
    %10 = vector.extract_strided_slice %2 {offsets = [0, 0], sizes = [512, 128], strides = [1, 1]} : vector<513x128xf32> to vector<512x128xf32>
    %cst_6 = arith.constant dense<0.000000e+00> : vector<8x128xf32>
    %11 = tpu.matmul %9, %10, %cst_6 {dimension_numbers = #tpu.dot_dimension_numbers<[1], [0], [0], [1], [0, 0, 1, 1], [], []>} : vector<8x512xf32>, vector<512x128xf32>, vector<8x128xf32> -> vector<8x128xf32>
    %12 = vector.extract_strided_slice %2 {offsets = [512, 0], sizes = [1, 128], strides = [1, 1]} : vector<513x128xf32> to vector<1x128xf32>
    %13 = vector.broadcast %12 : vector<1x128xf32> to vector<8x128xf32>
    %14 = arith.addf %11, %13 : vector<8x128xf32>
    %c0_7 = arith.constant 0 : index
    %c0_8 = arith.constant 0 : index
    %15 = vector.load %arg4[%c0_7, %c0_8] : memref<8x128xf32, #tpu.memory_space<vmem>>, vector<8x128xf32>
    tpu.vector_store %arg4[%c0_7, %c0_8], %14 {strides = array<i32>} : memref<8x128xf32, #tpu.memory_space<vmem>>, vector<8x128xf32>,
    return
  }
  func.func @transform_0(%arg0: i32) -> (i32, i32) {
    %c0_i32 = arith.constant 0 : i32
    %c0_i32_0 = arith.constant 0 : i32
    return %arg0, %c0_i32 : i32, i32
  }
  func.func @transform_1(%arg0: i32) -> (i32, i32) {
    %c0_i32 = arith.constant 0 : i32
    %c0_i32_0 = arith.constant 0 : i32
    %c0_i32_1 = arith.constant 0 : i32
    return %c0_i32, %c0_i32_0 : i32, i32
  }
  func.func @transform_2(%arg0: i32) -> (i32, i32) {
    %c0_i32 = arith.constant 0 : i32
    %c0_i32_0 = arith.constant 0 : i32
    %c0_i32_1 = arith.constant 0 : i32
    return %c0_i32, %c0_i32_0 : i32, i32
  }
  func.func @transform_3(%arg0: i32) -> (i32, i32) {
    %c0_i32 = arith.constant 0 : i32
    %c0_i32_0 = arith.constant 0 : i32
    return %arg0, %c0_i32 : i32, i32
  }
}

</mosaic_0001>

<llo_original>
// kernel: tpu_custom_call.1
$region0: #{tpu_custom_call.1}
  #allocation0 [shape = 'u32[]', space=smem, size = 0x4, offset = 0x4, fixed_abs, tag = 'smem constant byte address 0x4 - core index']
  #allocation1 [shape = 'u32[72,128]{1,0:T(1,128)}', space=vmem, size = 0x9000, scoped, tag = 'internal scratch']
  %s0 = inlined_call_operand.hbm [shape: f32[16,256], index: 0, kind: input, shape index: {}]
  %s1 = inlined_call_operand.hbm [shape: f32[257,512], index: 1, kind: input, shape index: {}]
  %s2 = inlined_call_operand.hbm [shape: f32[513,128], index: 2, kind: input, shape index: {}]
  %s3 = inlined_call_operand.hbm [shape: f32[16,128], index: 3, kind: output, shape index: {}]
  %s4 = sld [smem:[#allocation0]]
  $region57: #{tpu_custom_call.1} parent=0
    _
  %s6 = ssub.s32 1, %s4
  %s7 = scalar_select 0, %s6, %s4
  $region1: #{tpu_custom_call.1} parent=0
    #allocation2 [shape = 'u8[16384]{0}', space=vmem, size = 0x4000, scoped, tag = 'input window, operand 0']
    #allocation3 [shape = 's32[2]{0}', space=sflag, size = 0x8, scoped, tag = 'scoped memory for tpu_custom_call.1']
    #allocation4 [shape = 's32[2]{0}', space=sflag, size = 0x8, scoped, tag = 'scoped memory for tpu_custom_call.1']
    #allocation5 [shape = 'u8[540672]{0}', space=vmem, size = 0x84000, scoped, tag = 'input window, operand 1, single buffered']
    #allocation6 [shape = 's32[1]{0}', space=sflag, size = 0x4, scoped, tag = 'scoped memory for tpu_custom_call.1']
    #allocation7 [shape = 'u8[266240]{0}', space=vmem, size = 0x41000, scoped, tag = 'input window, operand 2, single buffered']
    #allocation8 [shape = 'u8[8192]{0}', space=vmem, size = 0x2000, scoped, tag = 'output window, operand 0']
    %8 = vsyncpa [#allocation3], 0
    %s9 = scalar_lea.sflag [#allocation3], 1
    %10 = vsyncpa %s9, 0
    %11 = vsyncpa [#allocation6], 0
    %12 = vsyncpa [#allocation4], 0
    %s13 = scalar_lea.sflag [#allocation4], 1
    %14 = vsyncpa %s13, 0
    loop: start=0, step=1, limit=4
    $region2: #{tpu_custom_call.1} parent=1 // loop_pre_header
      _
    $region3: #{tpu_custom_call.1} parent=1 // loop_header
      %s16 = sphi 0, %s20
      %p17 = scmp.ge.s32.totalorder %s16, 4
      %s26 = sphi 0, %s28
      %s29 = sphi 0, %s26
      %s30 = sphi 0, %s29
      %s46 = sphi 0, %s30
      %s50 = sphi 0, %s50
      %s52 = sphi 0, %s50
      %s53 = sphi 0, %s52
      %s67 = sphi 0, %s53
      %s71 = sphi 0, %s71
      %s73 = sphi 0, %s71
      %s74 = sphi 0, %s73
      %s88 = sphi 0, %s74
      %s94 = sphi 0, %s96
      %s97 = sphi 0, %s94
      %s98 = sphi 0, %s97
      %s114 = sphi 0, %s98
    $region4: #{tpu_custom_call.1} parent=1 // loop_header_branch
      %19 = sbr.rel (%p17) target = $region8
    $region5: #{tpu_custom_call.1} parent=1 // loop_body
      %s21 = ssub.s32 %s16, 1
      %s22 = ssub.s32 %s16, 2
      %s23 = sadd.s32 %s16, 1
      %s24 = ssub.s32 %s16, %s23
      %p25 = scmp.eq.s32.totalorder %s24, 0
      %s27 = sadd.s32 %s26, 1
      %s28 = scalar_select %p25, %s26, %s27
      %p31 = pneg %p25
      %p32 = scmp.eq.s32.totalorder %s16, 1
      %p33 = por %p31, %p32
      %p34 = scmp.ne.s32.totalorder %s26, %s29
      %p35 = scmp.eq.s32.totalorder %s16, 0
      %p36 = por %p34, %p35
      %p37 = scmp.ne.s32.totalorder %s26, %s29
      %p38 = scmp.eq.s32.totalorder %s21, 1
      %p39 = por %p37, %p38
      %p40 = scmp.ne.s32.totalorder %s29, %s30
      %p41 = scmp.eq.s32.totalorder %s21, 0
      %p42 = por %p40, %p41
      %p43 = scmp.ne.s32.totalorder %s29, %s30
      %p44 = scmp.eq.s32.totalorder %s22, 1
      %p45 = por %p43, %p44
      %p47 = scmp.ne.s32.totalorder %s30, %s46
      %p48 = scmp.eq.s32.totalorder %s22, 0
      %p49 = por %p47, %p48
      %s51 = sadd.s32 %s50, 1
      %p54 = scmp.eq.s32.totalorder %s16, 1
      %p55 = scmp.ne.s32.totalorder %s50, %s52
      %p56 = scmp.eq.s32.totalorder %s16, 0
      %p57 = por %p55, %p56
      %p58 = scmp.ne.s32.totalorder %s50, %s52
      %p59 = scmp.eq.s32.totalorder %s21, 1
      %p60 = por %p58, %p59
      %p61 = scmp.ne.s32.totalorder %s52, %s53
      %p62 = scmp.eq.s32.totalorder %s21, 0
      %p63 = por %p61, %p62
      %p64 = scmp.ne.s32.totalorder %s52, %s53
      %p65 = scmp.eq.s32.totalorder %s22, 1
      %p66 = por %p64, %p65
      %p68 = scmp.ne.s32.totalorder %s53, %s67
      %p69 = scmp.eq.s32.totalorder %s22, 0
      %p70 = por %p68, %p69
      %s72 = sadd.s32 %s71, 1
      %p75 = scmp.eq.s32.totalorder %s16, 1
      %p76 = scmp.ne.s32.totalorder %s71, %s73
      %p77 = scmp.eq.s32.totalorder %s16, 0
      %p78 = por %p76, %p77
      %p79 = scmp.ne.s32.totalorder %s71, %s73
      %p80 = scmp.eq.s32.totalorder %s21, 1
      %p81 = por %p79, %p80
      %p82 = scmp.ne.s32.totalorder %s73, %s74
      %p83 = scmp.eq.s32.totalorder %s21, 0
      %p84 = por %p82, %p83
      %p85 = scmp.ne.s32.totalorder %s73, %s74
      %p86 = scmp.eq.s32.totalorder %s22, 1
      %p87 = por %p85, %p86
      %p89 = scmp.ne.s32.totalorder %s74, %s88
      %p90 = scmp.eq.s32.totalorder %s22, 0
      %p91 = por %p89, %p90
      %s92 = ssub.s32 %s16, %s23
      %p93 = scmp.eq.s32.totalorder %s92, 0
      %s95 = sadd.s32 %s94, 1
      %s96 = scalar_select %p93, %s94, %s95
      %p99 = pneg %p93
      %p100 = scmp.eq.s32.totalorder %s16, 1
      %p101 = por %p99, %p100
      %p102 = scmp.ne.s32.totalorder %s94, %s97
      %p103 = scmp.eq.s32.totalorder %s16, 0
      %p104 = por %p102, %p103
      %p105 = scmp.ne.s32.totalorder %s94, %s97
      %p106 = scmp.eq.s32.totalorder %s21, 1
      %p107 = por %p105, %p106
      %p108 = scmp.ne.s32.totalorder %s97, %s98
      %p109 = scmp.eq.s32.totalorder %s21, 0
      %p110 = por %p108, %p109
      %p111 = scmp.ne.s32.totalorder %s97, %s98
      %p112 = scmp.eq.s32.totalorder %s22, 1
      %p113 = por %p111, %p112
      %p115 = scmp.ne.s32.totalorder %s98, %s114
      %p116 = scmp.eq.s32.totalorder %s22, 0
      %p117 = por %p115, %p116
      %p118 = scmp.le.s32.totalorder 1, %s16
      %p119 = scmp.lt.s32.totalorder %s16, 3
      %p120 = pnand %p118, %p119
      %p121 = pneg %p120
      // Predicated region
      $region9: #{tpu_custom_call.1} parent=5 // pred_check
        _
      $region10: #{tpu_custom_call.1} parent=5 // pred_check_branch
        %123 = sbr.rel (%p120) target = $region12
      $region11: #{tpu_custom_call.1} parent=5 // pred_region
        %s124 = ssub.s32 %s16, 1
        // Predicated region
        $region13: #{tpu_custom_call.1} parent=11 // pred_check
          %p125 = pneg %p63
        $region14: #{tpu_custom_call.1} parent=11 // pred_check_branch
          %127 = sbr.rel (%p125) target = $region16
        $region15: #{tpu_custom_call.1} parent=11 // pred_region
          %129 = vsyncadd [#allocation6], 0
          %s130 = sshll.u32 %s1, 4
          %s131 = int_to_ptr.hbm [resolvable:$true] %s130
          %s132 = sshll.u32 [#allocation5], 4
          %s133 = int_to_ptr.vmem [resolvable:$true] %s132
          %138 = dma.hbm_to_vmem [thread:$0]  %s131, 16896, %s133, [#allocation6], 512, 512, 32
        $region16: #{tpu_custom_call.1} parent=11 // pred_fallthru
          _
        // Predicated region
        $region17: #{tpu_custom_call.1} parent=11 // pred_check
          %p139 = pneg %p84
        $region18: #{tpu_custom_call.1} parent=11 // pred_check_branch
          %141 = sbr.rel (%p139) target = $region20
        $region19: #{tpu_custom_call.1} parent=11 // pred_region
          %143 = vsyncadd [#allocation6], 0
          %s144 = sshll.u32 %s2, 4
          %s145 = int_to_ptr.hbm [resolvable:$true] %s144
          %s146 = sshll.u32 [#allocation7], 4
          %s147 = int_to_ptr.vmem [resolvable:$true] %s146
          %152 = dma.hbm_to_vmem [thread:$0]  %s145, 8320, %s147, [#allocation6], 128, 128, 8
        $region20: #{tpu_custom_call.1} parent=11 // pred_fallthru
          _
      $region12: #{tpu_custom_call.1} parent=5 // pred_fallthru
        _
      %p153 = scmp.lt.s32.totalorder %s16, 2
      // Predicated region
      $region21: #{tpu_custom_call.1} parent=5 // pred_check
        %p154 = pneg %p153
      $region22: #{tpu_custom_call.1} parent=5 // pred_check_branch
        %156 = sbr.rel (%p154) target = $region24
      $region23: #{tpu_custom_call.1} parent=5 // pred_region
        // Predicated region
        $region25: #{tpu_custom_call.1} parent=23 // pred_check
          %p157 = pneg %p36
        $region26: #{tpu_custom_call.1} parent=23 // pred_check_branch
          %159 = sbr.rel (%p157) target = $region28
        $region27: #{tpu_custom_call.1} parent=23 // pred_region
          %s160 = sand.u32 %s26, 1
          %s161 = scalar_lea.sflag [#allocation3], %s160
          %s162 = sand.u32 %s26, 1
          %s163 = smul.addr %s162, 16
          %s164 = scalar_lea.vmem [#allocation2], %s163
          %166 = vsyncadd %s161, 0
          %s167 = smul.addr %s16, 2
          %s168 = smul.addr %s167, 8
          %s169 = scalar_lea.hbm %s0, %s168
          %s171 = sshll.u32 %s169, 4
          %s172 = int_to_ptr.hbm [resolvable:$true] %s171
          %s173 = sshll.u32 %s164, 4
          %s174 = int_to_ptr.vmem [resolvable:$true] %s173
          %176 = dma.hbm_to_vmem [thread:$0]  %s172, 256, %s174, %s161
        $region28: #{tpu_custom_call.1} parent=23 // pred_fallthru
          _
      $region24: #{tpu_custom_call.1} parent=5 // pred_fallthru
        _
      %p177 = scmp.le.s32.totalorder 1, %s16
      %p178 = scmp.lt.s32.totalorder %s16, 3
      %p179 = pnand %p177, %p178
      %p180 = pneg %p179
      // Predicated region
      $region29: #{tpu_custom_call.1} parent=5 // pred_check
        _
      $region30: #{tpu_custom_call.1} parent=5 // pred_check_branch
        %182 = sbr.rel (%p179) target = $region32
      $region31: #{tpu_custom_call.1} parent=5 // pred_region
        %s183 = ssub.s32 %s16, 1
        %s184 = sand.u32 %s29, 1
        %s185 = scalar_lea.sflag [#allocation3], %s184
        %s186 = sand.u32 %s29, 1
        %s187 = smul.addr %s186, 16
        %s188 = scalar_lea.vmem [#allocation2], %s187
        // Predicated region
        $region33: #{tpu_custom_call.1} parent=31 // pred_check
          %p189 = pneg %p42
        $region34: #{tpu_custom_call.1} parent=31 // pred_check_branch
          %191 = sbr.rel (%p189) target = $region36
        $region35: #{tpu_custom_call.1} parent=31 // pred_region
          %193 = dma.done %s185, 256
        $region36: #{tpu_custom_call.1} parent=31 // pred_fallthru
          _
        // Predicated region
        $region37: #{tpu_custom_call.1} parent=31 // pred_check
          %p194 = pneg %p63
        $region38: #{tpu_custom_call.1} parent=31 // pred_check_branch
          %196 = sbr.rel (%p194) target = $region40
        $region39: #{tpu_custom_call.1} parent=31 // pred_region
          %198 = dma.done [#allocation6], 16896
        $region40: #{tpu_custom_call.1} parent=31 // pred_fallthru
          _
        // Predicated region
        $region41: #{tpu_custom_call.1} parent=31 // pred_check
          %p199 = pneg %p84
        $region42: #{tpu_custom_call.1} parent=31 // pred_check_branch
          %201 = sbr.rel (%p199) target = $region44
        $region43: #{tpu_custom_call.1} parent=31 // pred_region
          %203 = dma.done [#allocation6], 8320
        $region44: #{tpu_custom_call.1} parent=31 // pred_fallthru
          _
        %s204 = sand.u32 %s29, 1
        %s205 = scalar_lea.sflag [#allocation3], %s204
        %s206 = sand.u32 %s29, 1
        %s207 = smul.addr %s206, 16
        %s208 = scalar_lea.vmem [#allocation2], %s207
        %p209 = pneg %p42
        %p210 = pneg %p39
        %p211 = pneg %p63
        %p212 = pneg %p60
        %p213 = pneg %p84
        %p214 = pneg %p81
        %p215 = pneg %p110
        %p216 = pneg %p107
        %s217 = sand.u32 %s97, 1
        %s218 = scalar_lea.sflag [#allocation4], %s217
        %s219 = sand.u32 %s97, 1
        %s220 = smul.addr %s219, 8
        %s221 = scalar_lea.vmem [#allocation8], %s220
        %v222 = vld [vmem:[%s188] sm:$0xff]
        %v223 = vld [vmem:[%s188 + $0x8] sm:$0xff]
        %v224 = vld [vmem:[#allocation5] sm:$0xff]
        %v225 = vld [vmem:[#allocation5 + $0x8] sm:$0xff]
        %v226 = vld [vmem:[#allocation5 + $0x10] sm:$0xff]
        %v227 = vld [vmem:[#allocation5 + $0x18] sm:$0xff]
        %v228 = vld [vmem:[#allocation5 + $0x20] sm:$0xff]
        %v229 = vld [vmem:[#allocation5 + $0x28] sm:$0xff]
        %v230 = vld [vmem:[#allocation5 + $0x30] sm:$0xff]
        %v231 = vld [vmem:[#allocation5 + $0x38] sm:$0xff]
        %v232 = vld [vmem:[#allocation5 + $0x40] sm:$0xff]
        %v233 = vld [vmem:[#allocation5 + $0x48] sm:$0xff]
        %v234 = vld [vmem:[#allocation5 + $0x50] sm:$0xff]
        %v235 = vld [vmem:[#allocation5 + $0x58] sm:$0xff]
        %v236 = vld [vmem:[#allocation5 + $0x60] sm:$0xff]
        %v237 = vld [vmem:[#allocation5 + $0x68] sm:$0xff]
        %v238 = vld [vmem:[#allocation5 + $0x70] sm:$0xff]
        %v239 = vld [vmem:[#allocation5 + $0x78] sm:$0xff]
        %v240 = vld [vmem:[#allocation5 + $0x80] sm:$0xff]
        %v241 = vld [vmem:[#allocation5 + $0x88] sm:$0xff]
        %v242 = vld [vmem:[#allocation5 + $0x90] sm:$0xff]
        %v243 = vld [vmem:[#allocation5 + $0x98] sm:$0xff]
        %v244 = vld [vmem:[#allocation5 + $0xa0] sm:$0xff]
        %v245 = vld [vmem:[#allocation5 + $0xa8] sm:$0xff]
        %v246 = vld [vmem:[#allocation5 + $0xb0] sm:$0xff]
        %v247 = vld [vmem:[#allocation5 + $0xb8] sm:$0xff]
        %v248 = vld [vmem:[#allocation5 + $0xc0] sm:$0xff]
        %v249 = vld [vmem:[#allocation5 + $0xc8] sm:$0xff]
        %v250 = vld [vmem:[#allocation5 + $0xd0] sm:$0xff]
        %v251 = vld [vmem:[#allocation5 + $0xd8] sm:$0xff]
        %v252 = vld [vmem:[#allocation5 + $0xe0] sm:$0xff]
        %v253 = vld [vmem:[#allocation5 + $0xe8] sm:$0xff]
        %v254 = vld [vmem:[#allocation5 + $0xf0] sm:$0xff]
        %v255 = vld [vmem:[#allocation5 + $0xf8] sm:$0xff]
        %v256 = vld [vmem:[#allocation5 + $0x100] sm:$0xff]
        %v257 = vld [vmem:[#allocation5 + $0x108] sm:$0xff]
        %v258 = vld [vmem:[#allocation5 + $0x110] sm:$0xff]
        %v259 = vld [vmem:[#allocation5 + $0x118] sm:$0xff]
        %v260 = vld [vmem:[#allocation5 + $0x120] sm:$0xff]
        %v261 = vld [vmem:[#allocation5 + $0x128] sm:$0xff]
        %v262 = vld [vmem:[#allocation5 + $0x130] sm:$0xff]
        %v263 = vld [vmem:[#allocation5 + $0x138] sm:$0xff]
        %v264 = vld [vmem:[#allocation5 + $0x140] sm:$0xff]
        %v265 = vld [vmem:[#allocation5 + $0x148] sm:$0xff]
        %v266 = vld [vmem:[#allocation5 + $0x150] sm:$0xff]
        %v267 = vld [vmem:[#allocation5 + $0x158] sm:$0xff]
        %v268 = vld [vmem:[#allocation5 + $0x160] sm:$0xff]
        %v269 = vld [vmem:[#allocation5 + $0x168] sm:$0xff]
        %v270 = vld [vmem:[#allocation5 + $0x170] sm:$0xff]
        %v271 = vld [vmem:[#allocation5 + $0x178] sm:$0xff]
        %v272 = vld [vmem:[#allocation5 + $0x180] sm:$0xff]
        %v273 = vld [vmem:[#allocation5 + $0x188] sm:$0xff]
        %v274 = vld [vmem:[#allocation5 + $0x190] sm:$0xff]
        %v275 = vld [vmem:[#allocation5 + $0x198] sm:$0xff]
        %v276 = vld [vmem:[#allocation5 + $0x1a0] sm:$0xff]
        %v277 = vld [vmem:[#allocation5 + $0x1a8] sm:$0xff]
        %v278 = vld [vmem:[#allocation5 + $0x1b0] sm:$0xff]
        %v279 = vld [vmem:[#allocation5 + $0x1b8] sm:$0xff]
        %v280 = vld [vmem:[#allocation5 + $0x1c0] sm:$0xff]
        %v281 = vld [vmem:[#allocation5 + $0x1c8] sm:$0xff]
        %v282 = vld [vmem:[#allocation5 + $0x1d0] sm:$0xff]
        %v283 = vld [vmem:[#allocation5 + $0x1d8] sm:$0xff]
        %v284 = vld [vmem:[#allocation5 + $0x1e0] sm:$0xff]
        %v285 = vld [vmem:[#allocation5 + $0x1e8] sm:$0xff]
        %v286 = vld [vmem:[#allocation5 + $0x1f0] sm:$0xff]
        %v287 = vld [vmem:[#allocation5 + $0x1f8] sm:$0xff]
        %v288 = vld [vmem:[#allocation5 + $0x200] sm:$0xff]
        %v289 = vld [vmem:[#allocation5 + $0x208] sm:$0xff]
        %v290 = vld [vmem:[#allocation5 + $0x210] sm:$0xff]
        %v291 = vld [vmem:[#allocation5 + $0x218] sm:$0xff]
        %v292 = vld [vmem:[#allocation5 + $0x220] sm:$0xff]
        %v293 = vld [vmem:[#allocation5 + $0x228] sm:$0xff]
        %v294 = vld [vmem:[#allocation5 + $0x230] sm:$0xff]
        %v295 = vld [vmem:[#allocation5 + $0x238] sm:$0xff]
        %v296 = vld [vmem:[#allocation5 + $0x240] sm:$0xff]
        %v297 = vld [vmem:[#allocation5 + $0x248] sm:$0xff]
        %v298 = vld [vmem:[#allocation5 + $0x250] sm:$0xff]
        %v299 = vld [vmem:[#allocation5 + $0x258] sm:$0xff]
        %v300 = vld [vmem:[#allocation5 + $0x260] sm:$0xff]
        %v301 = vld [vmem:[#allocation5 + $0x268] sm:$0xff]
        %v302 = vld [vmem:[#allocation5 + $0x270] sm:$0xff]
        %v303 = vld [vmem:[#allocation5 + $0x278] sm:$0xff]
        %v304 = vld [vmem:[#allocation5 + $0x280] sm:$0xff]
        %v305 = vld [vmem:[#allocation5 + $0x288] sm:$0xff]
        %v306 = vld [vmem:[#allocation5 + $0x290] sm:$0xff]
        %v307 = vld [vmem:[#allocation5 + $0x298] sm:$0xff]
        %v308 = vld [vmem:[#allocation5 + $0x2a0] sm:$0xff]
        %v309 = vld [vmem:[#allocation5 + $0x2a8] sm:$0xff]
        %v310 = vld [vmem:[#allocation5 + $0x2b0] sm:$0xff]
        %v311 = vld [vmem:[#allocation5 + $0x2b8] sm:$0xff]
        %v312 = vld [vmem:[#allocation5 + $0x2c0] sm:$0xff]
        %v313 = vld [vmem:[#allocation5 + $0x2c8] sm:$0xff]
        %v314 = vld [vmem:[#allocation5 + $0x2d0] sm:$0xff]
        %v315 = vld [vmem:[#allocation5 + $0x2d8] sm:$0xff]
        %v316 = vld [vmem:[#allocation5 + $0x2e0] sm:$0xff]
        %v317 = vld [vmem:[#allocation5 + $0x2e8] sm:$0xff]
        %v318 = vld [vmem:[#allocation5 + $0x2f0] sm:$0xff]
        %v319 = vld [vmem:[#allocation5 + $0x2f8] sm:$0xff]
        %v320 = vld [vmem:[#allocation5 + $0x300] sm:$0xff]
        %v321 = vld [vmem:[#allocation5 + $0x308] sm:$0xff]
        %v322 = vld [vmem:[#allocation5 + $0x310] sm:$0xff]
        %v323 = vld [vmem:[#allocation5 + $0x318] sm:$0xff]
        %v324 = vld [vmem:[#allocation5 + $0x320] sm:$0xff]
        %v325 = vld [vmem:[#allocation5 + $0x328] sm:$0xff]
        %v326 = vld [vmem:[#allocation5 + $0x330] sm:$0xff]
        %v327 = vld [vmem:[#allocation5 + $0x338] sm:$0xff]
        %v328 = vld [vmem:[#allocation5 + $0x340] sm:$0xff]
        %v329 = vld [vmem:[#allocation5 + $0x348] sm:$0xff]
        %v330 = vld [vmem:[#allocation5 + $0x350] sm:$0xff]
        %v331 = vld [vmem:[#allocation5 + $0x358] sm:$0xff]
        %v332 = vld [vmem:[#allocation5 + $0x360] sm:$0xff]
        %v333 = vld [vmem:[#allocation5 + $0x368] sm:$0xff]
        %v334 = vld [vmem:[#allocation5 + $0x370] sm:$0xff]
        %v335 = vld [vmem:[#allocation5 + $0x378] sm:$0xff]
        %v336 = vld [vmem:[#allocation5 + $0x380] sm:$0xff]
        %v337 = vld [vmem:[#allocation5 + $0x388] sm:$0xff]
        %v338 = vld [vmem:[#allocation5 + $0x390] sm:$0xff]
        %v339 = vld [vmem:[#allocation5 + $0x398] sm:$0xff]
        %v340 = vld [vmem:[#allocation5 + $0x3a0] sm:$0xff]
        %v341 = vld [vmem:[#allocation5 + $0x3a8] sm:$0xff]
        %v342 = vld [vmem:[#allocation5 + $0x3b0] sm:$0xff]
        %v343 = vld [vmem:[#allocation5 + $0x3b8] sm:$0xff]
        %v344 = vld [vmem:[#allocation5 + $0x3c0] sm:$0xff]
        %v345 = vld [vmem:[#allocation5 + $0x3c8] sm:$0xff]
        %v346 = vld [vmem:[#allocation5 + $0x3d0] sm:$0xff]
        %v347 = vld [vmem:[#allocation5 + $0x3d8] sm:$0xff]
        %v348 = vld [vmem:[#allocation5 + $0x3e0] sm:$0xff]
        %v349 = vld [vmem:[#allocation5 + $0x3e8] sm:$0xff]
        %v350 = vld [vmem:[#allocation5 + $0x3f0] sm:$0xff]
        %v351 = vld [vmem:[#allocation5 + $0x3f8] sm:$0xff]
        %v352 = vld [vmem:[#allocation5 + $0x400] sm:$0x1]
        %v353 = vld [vmem:[#allocation5 + $0x408] sm:$0x1]
        %v354 = vld [vmem:[#allocation5 + $0x410] sm:$0x1]
        %v355 = vld [vmem:[#allocation5 + $0x418] sm:$0x1]
        %v356 = vld [vmem:[#allocation7] sm:$0xff]
        %v357 = vld [vmem:[#allocation7 + $0x8] sm:$0xff]
        %v358 = vld [vmem:[#allocation7 + $0x10] sm:$0xff]
        %v359 = vld [vmem:[#allocation7 + $0x18] sm:$0xff]
        %v360 = vld [vmem:[#allocation7 + $0x20] sm:$0xff]
        %v361 = vld [vmem:[#allocation7 + $0x28] sm:$0xff]
        %v362 = vld [vmem:[#allocation7 + $0x30] sm:$0xff]
        %v363 = vld [vmem:[#allocation7 + $0x38] sm:$0xff]
        %v364 = vld [vmem:[#allocation7 + $0x40] sm:$0xff]
        %v365 = vld [vmem:[#allocation7 + $0x48] sm:$0xff]
        %v366 = vld [vmem:[#allocation7 + $0x50] sm:$0xff]
        %v367 = vld [vmem:[#allocation7 + $0x58] sm:$0xff]
        %v368 = vld [vmem:[#allocation7 + $0x60] sm:$0xff]
        %v369 = vld [vmem:[#allocation7 + $0x68] sm:$0xff]
        %v370 = vld [vmem:[#allocation7 + $0x70] sm:$0xff]
        %v371 = vld [vmem:[#allocation7 + $0x78] sm:$0xff]
        %v372 = vld [vmem:[#allocation7 + $0x80] sm:$0xff]
        %v373 = vld [vmem:[#allocation7 + $0x88] sm:$0xff]
        %v374 = vld [vmem:[#allocation7 + $0x90] sm:$0xff]
        %v375 = vld [vmem:[#allocation7 + $0x98] sm:$0xff]
        %v376 = vld [vmem:[#allocation7 + $0xa0] sm:$0xff]
        %v377 = vld [vmem:[#allocation7 + $0xa8] sm:$0xff]
        %v378 = vld [vmem:[#allocation7 + $0xb0] sm:$0xff]
        %v379 = vld [vmem:[#allocation7 + $0xb8] sm:$0xff]
        %v380 = vld [vmem:[#allocation7 + $0xc0] sm:$0xff]
        %v381 = vld [vmem:[#allocation7 + $0xc8] sm:$0xff]
        %v382 = vld [vmem:[#allocation7 + $0xd0] sm:$0xff]
        %v383 = vld [vmem:[#allocation7 + $0xd8] sm:$0xff]
        %v384 = vld [vmem:[#allocation7 + $0xe0] sm:$0xff]
        %v385 = vld [vmem:[#allocation7 + $0xe8] sm:$0xff]
        %v386 = vld [vmem:[#allocation7 + $0xf0] sm:$0xff]
        %v387 = vld [vmem:[#allocation7 + $0xf8] sm:$0xff]
        %v388 = vld [vmem:[#allocation7 + $0x100] sm:$0xff]
        %v389 = vld [vmem:[#allocation7 + $0x108] sm:$0xff]
        %v390 = vld [vmem:[#allocation7 + $0x110] sm:$0xff]
        %v391 = vld [vmem:[#allocation7 + $0x118] sm:$0xff]
        %v392 = vld [vmem:[#allocation7 + $0x120] sm:$0xff]
        %v393 = vld [vmem:[#allocation7 + $0x128] sm:$0xff]
        %v394 = vld [vmem:[#allocation7 + $0x130] sm:$0xff]
        %v395 = vld [vmem:[#allocation7 + $0x138] sm:$0xff]
        %v396 = vld [vmem:[#allocation7 + $0x140] sm:$0xff]
        %v397 = vld [vmem:[#allocation7 + $0x148] sm:$0xff]
        %v398 = vld [vmem:[#allocation7 + $0x150] sm:$0xff]
        %v399 = vld [vmem:[#allocation7 + $0x158] sm:$0xff]
        %v400 = vld [vmem:[#allocation7 + $0x160] sm:$0xff]
        %v401 = vld [vmem:[#allocation7 + $0x168] sm:$0xff]
        %v402 = vld [vmem:[#allocation7 + $0x170] sm:$0xff]
        %v403 = vld [vmem:[#allocation7 + $0x178] sm:$0xff]
        %v404 = vld [vmem:[#allocation7 + $0x180] sm:$0xff]
        %v405 = vld [vmem:[#allocation7 + $0x188] sm:$0xff]
        %v406 = vld [vmem:[#allocation7 + $0x190] sm:$0xff]
        %v407 = vld [vmem:[#allocation7 + $0x198] sm:$0xff]
        %v408 = vld [vmem:[#allocation7 + $0x1a0] sm:$0xff]
        %v409 = vld [vmem:[#allocation7 + $0x1a8] sm:$0xff]
        %v410 = vld [vmem:[#allocation7 + $0x1b0] sm:$0xff]
        %v411 = vld [vmem:[#allocation7 + $0x1b8] sm:$0xff]
        %v412 = vld [vmem:[#allocation7 + $0x1c0] sm:$0xff]
        %v413 = vld [vmem:[#allocation7 + $0x1c8] sm:$0xff]
        %v414 = vld [vmem:[#allocation7 + $0x1d0] sm:$0xff]
        %v415 = vld [vmem:[#allocation7 + $0x1d8] sm:$0xff]
        %v416 = vld [vmem:[#allocation7 + $0x1e0] sm:$0xff]
        %v417 = vld [vmem:[#allocation7 + $0x1e8] sm:$0xff]
        %v418 = vld [vmem:[#allocation7 + $0x1f0] sm:$0xff]
        %v419 = vld [vmem:[#allocation7 + $0x1f8] sm:$0xff]
        %v420 = vld [vmem:[#allocation7 + $0x200] sm:$0x1]
        %v421 = vperm.slane %v352, 0
        %v422 = vperm.slane %v353, 0
        %v423 = vperm.slane %v354, 0
        %v424 = vperm.slane %v355, 0
        %425 = vmatpush.msra.mxu0 %v284
        %426 = vmatpush.msra.mxu0 %v280
        %427 = vmatpush.msra.mxu0 %v276
        %428 = vmatpush.msra.mxu0 %v272
        %429 = vmatpush.msra.mxu0 %v268
        %430 = vmatpush.msra.mxu0 %v264
        %431 = vmatpush.msra.mxu0 %v260
        %432 = vmatpush.msra.mxu0 %v256
        %433 = vmatpush.msra.mxu0 %v252
        %434 = vmatpush.msra.mxu0 %v248
        %435 = vmatpush.msra.mxu0 %v244
        %436 = vmatpush.msra.mxu0 %v240
        %437 = vmatpush.msra.mxu0 %v236
        %438 = vmatpush.msra.mxu0 %v232
        %439 = vmatpush.msra.mxu0 %v228
        %440 = vmatpush.msra.mxu0 %v224
        %441 = vmatmul.f32.gmra.mxu0 %v222
        %v442 = vpop.f32.mrf.mxu0
        %v443 = vadd.f32 %v421, %v442
        %444 = vdwg.mxu0
        %445 = vmatpush.msra.mxu0 %v348
        %446 = vmatpush.msra.mxu0 %v344
        %447 = vmatpush.msra.mxu0 %v340
        %448 = vmatpush.msra.mxu0 %v336
        %449 = vmatpush.msra.mxu0 %v332
        %450 = vmatpush.msra.mxu0 %v328
        %451 = vmatpush.msra.mxu0 %v324
        %452 = vmatpush.msra.mxu0 %v320
        %453 = vmatpush.msra.mxu0 %v316
        %454 = vmatpush.msra.mxu0 %v312
        %455 = vmatpush.msra.mxu0 %v308
        %456 = vmatpush.msra.mxu0 %v304
        %457 = vmatpush.msra.mxu0 %v300
        %458 = vmatpush.msra.mxu0 %v296
        %459 = vmatpush.msra.mxu0 %v292
        %460 = vmatpush.msra.mxu0 %v288
        %461 = vmatmul.f32.gmra.mxu0 %v223
        %v462 = vpop.f32.mrf.mxu0
        %v463 = vadd.f32 %v443, %v462
        %464 = vdwg.mxu0
        %465 = vmatpush.msra.mxu0 %v285
        %466 = vmatpush.msra.mxu0 %v281
        %467 = vmatpush.msra.mxu0 %v277
        %468 = vmatpush.msra.mxu0 %v273
        %469 = vmatpush.msra.mxu0 %v269
        %470 = vmatpush.msra.mxu0 %v265
        %471 = vmatpush.msra.mxu0 %v261
        %472 = vmatpush.msra.mxu0 %v257
        %473 = vmatpush.msra.mxu0 %v253
        %474 = vmatpush.msra.mxu0 %v249
        %475 = vmatpush.msra.mxu0 %v245
        %476 = vmatpush.msra.mxu0 %v241
        %477 = vmatpush.msra.mxu0 %v237
        %478 = vmatpush.msra.mxu0 %v233
        %479 = vmatpush.msra.mxu0 %v229
        %480 = vmatpush.msra.mxu0 %v225
        %481 = vmatmul.f32.gmra.mxu0 %v222
        %v482 = vpop.f32.mrf.mxu0
        %v483 = vadd.f32 %v422, %v482
        %484 = vdwg.mxu0
        %485 = vmatpush.msra.mxu0 %v349
        %486 = vmatpush.msra.mxu0 %v345
        %487 = vmatpush.msra.mxu0 %v341
        %488 = vmatpush.msra.mxu0 %v337
        %489 = vmatpush.msra.mxu0 %v333
        %490 = vmatpush.msra.mxu0 %v329
        %491 = vmatpush.msra.mxu0 %v325
        %492 = vmatpush.msra.mxu0 %v321
        %493 = vmatpush.msra.mxu0 %v317
        %494 = vmatpush.msra.mxu0 %v313
        %495 = vmatpush.msra.mxu0 %v309
        %496 = vmatpush.msra.mxu0 %v305
        %497 = vmatpush.msra.mxu0 %v301
        %498 = vmatpush.msra.mxu0 %v297
        %499 = vmatpush.msra.mxu0 %v293
        %500 = vmatpush.msra.mxu0 %v289
        %501 = vmatmul.f32.gmra.mxu0 %v223
        %v502 = vpop.f32.mrf.mxu0
        %v503 = vadd.f32 %v483, %v502
        %504 = vdwg.mxu0
        %505 = vmatpush.msra.mxu0 %v286
        %506 = vmatpush.msra.mxu0 %v282
        %507 = vmatpush.msra.mxu0 %v278
        %508 = vmatpush.msra.mxu0 %v274
        %509 = vmatpush.msra.mxu0 %v270
        %510 = vmatpush.msra.mxu0 %v266
        %511 = vmatpush.msra.mxu0 %v262
        %512 = vmatpush.msra.mxu0 %v258
        %513 = vmatpush.msra.mxu0 %v254
        %514 = vmatpush.msra.mxu0 %v250
        %515 = vmatpush.msra.mxu0 %v246
        %516 = vmatpush.msra.mxu0 %v242
        %517 = vmatpush.msra.mxu0 %v238
        %518 = vmatpush.msra.mxu0 %v234
        %519 = vmatpush.msra.mxu0 %v230
        %520 = vmatpush.msra.mxu0 %v226
        %521 = vmatmul.f32.gmra.mxu0 %v222
        %v522 = vpop.f32.mrf.mxu0
        %v523 = vadd.f32 %v423, %v522
        %524 = vdwg.mxu0
        %525 = vmatpush.msra.mxu0 %v350
        %526 = vmatpush.msra.mxu0 %v346
        %527 = vmatpush.msra.mxu0 %v342
        %528 = vmatpush.msra.mxu0 %v338
        %529 = vmatpush.msra.mxu0 %v334
        %530 = vmatpush.msra.mxu0 %v330
        %531 = vmatpush.msra.mxu0 %v326
        %532 = vmatpush.msra.mxu0 %v322
        %533 = vmatpush.msra.mxu0 %v318
        %534 = vmatpush.msra.mxu0 %v314
        %535 = vmatpush.msra.mxu0 %v310
        %536 = vmatpush.msra.mxu0 %v306
        %537 = vmatpush.msra.mxu0 %v302
        %538 = vmatpush.msra.mxu0 %v298
        %539 = vmatpush.msra.mxu0 %v294
        %540 = vmatpush.msra.mxu0 %v290
        %541 = vmatmul.f32.gmra.mxu0 %v223
        %v542 = vpop.f32.mrf.mxu0
        %v543 = vadd.f32 %v523, %v542
        %544 = vdwg.mxu0
        %545 = vmatpush.msra.mxu0 %v287
        %546 = vmatpush.msra.mxu0 %v283
        %547 = vmatpush.msra.mxu0 %v279
        %548 = vmatpush.msra.mxu0 %v275
        %549 = vmatpush.msra.mxu0 %v271
        %550 = vmatpush.msra.mxu0 %v267
        %551 = vmatpush.msra.mxu0 %v263
        %552 = vmatpush.msra.mxu0 %v259
        %553 = vmatpush.msra.mxu0 %v255
        %554 = vmatpush.msra.mxu0 %v251
        %555 = vmatpush.msra.mxu0 %v247
        %556 = vmatpush.msra.mxu0 %v243
        %557 = vmatpush.msra.mxu0 %v239
        %558 = vmatpush.msra.mxu0 %v235
        %559 = vmatpush.msra.mxu0 %v231
        %560 = vmatpush.msra.mxu0 %v227
        %561 = vmatmul.f32.gmra.mxu0 %v222
        %v562 = vpop.f32.mrf.mxu0
        %v563 = vadd.f32 %v424, %v562
        %564 = vdwg.mxu0
        %565 = vmatpush.msra.mxu0 %v351
        %566 = vmatpush.msra.mxu0 %v347
        %567 = vmatpush.msra.mxu0 %v343
        %568 = vmatpush.msra.mxu0 %v339
        %569 = vmatpush.msra.mxu0 %v335
        %570 = vmatpush.msra.mxu0 %v331
        %571 = vmatpush.msra.mxu0 %v327
        %572 = vmatpush.msra.mxu0 %v323
        %573 = vmatpush.msra.mxu0 %v319
        %574 = vmatpush.msra.mxu0 %v315
        %575 = vmatpush.msra.mxu0 %v311
        %576 = vmatpush.msra.mxu0 %v307
        %577 = vmatpush.msra.mxu0 %v303
        %578 = vmatpush.msra.mxu0 %v299
        %579 = vmatpush.msra.mxu0 %v295
        %580 = vmatpush.msra.mxu0 %v291
        %581 = vmatmul.f32.gmra.mxu0 %v223
        %v582 = vpop.f32.mrf.mxu0
        %v583 = vadd.f32 %v563, %v582
        %584 = vdwg.mxu0
        %v585 = vmax.f32 %v463, 0.0
        %v586 = vmax.f32 %v503, 0.0
        %v587 = vmax.f32 %v543, 0.0
        %v588 = vmax.f32 %v583, 0.0
        %v589 = vperm.slane %v420, 0
        %590 = vmatpush.msra.mxu0 %v371
        %591 = vmatpush.msra.mxu0 %v370
        %592 = vmatpush.msra.mxu0 %v369
        %593 = vmatpush.msra.mxu0 %v368
        %594 = vmatpush.msra.mxu0 %v367
        %595 = vmatpush.msra.mxu0 %v366
        %596 = vmatpush.msra.mxu0 %v365
        %597 = vmatpush.msra.mxu0 %v364
        %598 = vmatpush.msra.mxu0 %v363
        %599 = vmatpush.msra.mxu0 %v362
        %600 = vmatpush.msra.mxu0 %v361
        %601 = vmatpush.msra.mxu0 %v360
        %602 = vmatpush.msra.mxu0 %v359
        %603 = vmatpush.msra.mxu0 %v358
        %604 = vmatpush.msra.mxu0 %v357
        %605 = vmatpush.msra.mxu0 %v356
        %606 = vmatmul.f32.gmra.mxu0 %v585
        %v607 = vpop.f32.mrf.mxu0
        %v608 = vadd.f32 %v589, %v607
        %609 = vdwg.mxu0
        %610 = vmatpush.msra.mxu0 %v387
        %611 = vmatpush.msra.mxu0 %v386
        %612 = vmatpush.msra.mxu0 %v385
        %613 = vmatpush.msra.mxu0 %v384
        %614 = vmatpush.msra.mxu0 %v383
        %615 = vmatpush.msra.mxu0 %v382
        %616 = vmatpush.msra.mxu0 %v381
        %617 = vmatpush.msra.mxu0 %v380
        %618 = vmatpush.msra.mxu0 %v379
        %619 = vmatpush.msra.mxu0 %v378
        %620 = vmatpush.msra.mxu0 %v377
        %621 = vmatpush.msra.mxu0 %v376
        %622 = vmatpush.msra.mxu0 %v375
        %623 = vmatpush.msra.mxu0 %v374
        %624 = vmatpush.msra.mxu0 %v373
        %625 = vmatpush.msra.mxu0 %v372
        %626 = vmatmul.f32.gmra.mxu0 %v586
        %v627 = vpop.f32.mrf.mxu0
        %v628 = vadd.f32 %v608, %v627
        %629 = vdwg.mxu0
        %630 = vmatpush.msra.mxu0 %v403
        %631 = vmatpush.msra.mxu0 %v402
        %632 = vmatpush.msra.mxu0 %v401
        %633 = vmatpush.msra.mxu0 %v400
        %634 = vmatpush.msra.mxu0 %v399
        %635 = vmatpush.msra.mxu0 %v398
        %636 = vmatpush.msra.mxu0 %v397
        %637 = vmatpush.msra.mxu0 %v396
        %638 = vmatpush.msra.mxu0 %v395
        %639 = vmatpush.msra.mxu0 %v394
        %640 = vmatpush.msra.mxu0 %v393
        %641 = vmatpush.msra.mxu0 %v392
        %642 = vmatpush.msra.mxu0 %v391
        %643 = vmatpush.msra.mxu0 %v390
        %644 = vmatpush.msra.mxu0 %v389
        %645 = vmatpush.msra.mxu0 %v388
        %646 = vmatmul.f32.gmra.mxu0 %v587
        %v647 = vpop.f32.mrf.mxu0
        %v648 = vadd.f32 %v628, %v647
        %649 = vdwg.mxu0
        %650 = vmatpush.msra.mxu0 %v419
        %651 = vmatpush.msra.mxu0 %v418
        %652 = vmatpush.msra.mxu0 %v417
        %653 = vmatpush.msra.mxu0 %v416
        %654 = vmatpush.msra.mxu0 %v415
        %655 = vmatpush.msra.mxu0 %v414
        %656 = vmatpush.msra.mxu0 %v413
        %657 = vmatpush.msra.mxu0 %v412
        %658 = vmatpush.msra.mxu0 %v411
        %659 = vmatpush.msra.mxu0 %v410
        %660 = vmatpush.msra.mxu0 %v409
        %661 = vmatpush.msra.mxu0 %v408
        %662 = vmatpush.msra.mxu0 %v407
        %663 = vmatpush.msra.mxu0 %v406
        %664 = vmatpush.msra.mxu0 %v405
        %665 = vmatpush.msra.mxu0 %v404
        %666 = vmatmul.f32.gmra.mxu0 %v588
        %v667 = vpop.f32.mrf.mxu0
        %v668 = vadd.f32 %v648, %v667
        %669 = vdwg.mxu0
        %670 = vst [vmem:[%s221] sm:$0xff] %v668
        %s671 = sand.u32 %s97, 1
        %s672 = scalar_lea.sflag [#allocation4], %s671
        %s673 = sand.u32 %s97, 1
        %s674 = smul.addr %s673, 8
        %s675 = scalar_lea.vmem [#allocation8], %s674
        // Predicated region
        $region45: #{tpu_custom_call.1} parent=31 // pred_check
          %p676 = pneg %p107
        $region46: #{tpu_custom_call.1} parent=31 // pred_check_branch
          %678 = sbr.rel (%p676) target = $region48
        $region47: #{tpu_custom_call.1} parent=31 // pred_region
          %680 = vsyncadd %s672, 0
          %s681 = smul.addr %s21, 8
          %s682 = scalar_lea.hbm %s3, %s681
          %s684 = sshll.u32 %s675, 4
          %s685 = int_to_ptr.vmem [resolvable:$true] %s684
          %s686 = sshll.u32 %s682, 4
          %s687 = int_to_ptr.hbm [resolvable:$true] %s686
          %689 = dma.vmem_to_hbm [thread:$0]  %s685, 128, %s687, %s672
        $region48: #{tpu_custom_call.1} parent=31 // pred_fallthru
          _
      $region32: #{tpu_custom_call.1} parent=5 // pred_fallthru
        _
      %p690 = scmp.le.s32.totalorder 2, %s16
      // Predicated region
      $region49: #{tpu_custom_call.1} parent=5 // pred_check
        %p691 = pneg %p690
      $region50: #{tpu_custom_call.1} parent=5 // pred_check_branch
        %693 = sbr.rel (%p691) target = $region52
      $region51: #{tpu_custom_call.1} parent=5 // pred_region
        %s694 = ssub.s32 %s16, 2
        // Predicated region
        $region53: #{tpu_custom_call.1} parent=51 // pred_check
          %p695 = pneg %p113
        $region54: #{tpu_custom_call.1} parent=51 // pred_check_branch
          %697 = sbr.rel (%p695) target = $region56
        $region55: #{tpu_custom_call.1} parent=51 // pred_region
          %s698 = sand.u32 %s98, 1
          %s699 = scalar_lea.sflag [#allocation4], %s698
          %s700 = sand.u32 %s98, 1
          %s701 = smul.addr %s700, 8
          %s702 = scalar_lea.vmem [#allocation8], %s701
          %704 = dma.done %s699, 128
        $region56: #{tpu_custom_call.1} parent=51 // pred_fallthru
          _
      $region52: #{tpu_custom_call.1} parent=5 // pred_fallthru
        _
    $region6: #{tpu_custom_call.1} parent=1 // loop_footer
      %s20 = sadd.s32 1, %s16
    $region7: #{tpu_custom_call.1} parent=1 // loop_footer_branch
      %15 = sbr.rel target = $region3
    $region8: #{tpu_custom_call.1} parent=1 // loop_exit
      _
    %705 = vsyncpa [#allocation3], 1
    %s706 = scalar_lea.sflag [#allocation3], 1
    %707 = vsyncpa %s706, 1
    %708 = vsyncpa [#allocation6], 1
    %709 = vsyncpa [#allocation4], 1
    %s710 = scalar_lea.sflag [#allocation4], 1
    %711 = vsyncpa %s710, 1

</llo_original>
